<compile_context>
chip_gen: v5e
topology: v5e:2x2
jax: 0.10.0
libtpu: 0.0.40
codegen_flags: <defaults>
</compile_context>

<pallas_src>
import functools
import math

import jax
import jax.numpy as jnp
from jax.experimental import pallas as pl
from jax.experimental.pallas import tpu as pltpu

LANE = 128      # lane width (last-dim quantum)
SUBLANE = 8     # f32 sublane quantum (second-to-last dim)


def _round_up(x, m):
    return (x + m - 1) // m * m


# --------------------------------------------------------------------------
# Kernel: one batch tile through all three layers, parameters VMEM-resident.
# --------------------------------------------------------------------------
def _mlp_kernel(x_ref, w_ref, b_ref, o_ref):
    x = x_ref[...]                      # (TILE_B, F) f32
    b = b_ref[...]                      # (3, F)      f32

    # layer 1: Linear + tanh    (tanh goes to the EUP; accumulate in f32)
    h = jnp.dot(x, w_ref[0], preferred_element_type=jnp.float32) + b[0:1, :]
    h = jnp.tanh(h)

    # layer 2: Linear + tanh
    h = jnp.dot(h, w_ref[1], preferred_element_type=jnp.float32) + b[1:2, :]
    h = jnp.tanh(h)

    # layer 3: Linear (no activation)
    o = jnp.dot(h, w_ref[2], preferred_element_type=jnp.float32) + b[2:3, :]
    o_ref[...] = o.astype(o_ref.dtype)


# --------------------------------------------------------------------------
# Parameter packing: do this ONCE per set of weights, reuse across calls.
# --------------------------------------------------------------------------
def pack_params(w1, b1, w2, b2, w3, b3):
    """Pack (pre-transposed) weights/biases into two padded slabs.

    w_i : (in_features_i, out_features_i)  -- i.e. PyTorch W.T
    b_i : (out_features_i,) or (1, out_features_i)

    Returns:
      w_slab : (3, F, F) f32, zero-padded       (single DMA per kernel call)
      b_slab : (3, F)    f32, zero-padded       (single DMA per kernel call)
    NOTE: on v6e/v7x, casting w_slab to bfloat16 (keeping f32 activations and
    f32 accumulation) halves weight DMA bytes once the kernel is batch-tiled.
    """
    dims = (w1.shape[0], w1.shape[1], w2.shape[1], w3.shape[1])
    feat = max(_round_up(d, LANE) for d in dims)

    def pad_w(w):
        out = jnp.zeros((feat, feat), jnp.float32)
        return out.at[: w.shape[0], : w.shape[1]].set(w.astype(jnp.float32))

    def pad_b(b):
        b = b.reshape(-1).astype(jnp.float32)
        return jnp.zeros((feat,), jnp.float32).at[: b.shape[0]].set(b)

    w_slab = jnp.stack([pad_w(w1), pad_w(w2), pad_w(w3)])    # (3, F, F)
    b_slab = jnp.stack([pad_b(b1), pad_b(b2), pad_b(b3)])    # (3, F)
    return w_slab, b_slab


# --------------------------------------------------------------------------
# Forward pass on packed parameters.
# --------------------------------------------------------------------------
@functools.partial(jax.jit, static_argnames=("out_size", "tile_b"))
def linear_qnet_forward_packed(x, w_slab, b_slab, out_size, tile_b):
    B, in_size = x.shape
    feat = w_slab.shape[-1]

    # Pad batch to a whole number of sublane-aligned tiles, features to F.
    b_pad = _round_up(max(B, 1), tile_b)
    xp = jnp.zeros((b_pad, feat), jnp.float32)
    xp = xp.at[:B, :in_size].set(x.astype(jnp.float32))

    grid = (b_pad // tile_b,)

    flops = 3 * 2 * b_pad * feat * feat + 3 * b_pad * feat     # 3 matmuls + bias adds
    bytes_accessed = 4 * (b_pad * feat * 2 + w_slab.size + b_slab.size)
    transcendentals = 2 * b_pad * feat                          # two tanh layers

    out_padded = pl.pallas_call(
        _mlp_kernel,
        out_shape=jax.ShapeDtypeStruct((b_pad, feat), jnp.float32),
        grid=grid,
        in_specs=[
            # activation tile streams with the grid
            pl.BlockSpec((tile_b, feat), lambda i: (i, 0)),
            # parameter slabs: constant block index -> stay VMEM-resident
            pl.BlockSpec((3, feat, feat), lambda i: (0, 0, 0)),
            pl.BlockSpec((3, feat), lambda i: (0, 0)),
        ],
        out_specs=pl.BlockSpec((tile_b, feat), lambda i: (i, 0)),
        compiler_params=pltpu.CompilerParams(
            dimension_semantics=("parallel",)),   # shards across v7x's 2 TCs
        cost_estimate=pl.CostEstimate(
            flops=int(flops),
            transcendentals=int(transcendentals),
            bytes_accessed=int(bytes_accessed)),
    )(xp, w_slab, b_slab)

    # Un-pad outside the kernel (keeps the kernel store lane-dense).
    return out_padded[:B, :out_size]


def linear_qnet_forward(x, w1, b1, w2, b2, w3, b3):
    """Convenience wrapper with the original unpacked signature.

    For real workloads, call pack_params() once and reuse
    linear_qnet_forward_packed() to amortize packing + launch overhead over
    large batches.
    """
    w_slab, b_slab = pack_params(w1, b1, w2, b2, w3, b3)
    out_size = w3.shape[1]
    # Cap the batch tile: tiny for tiny batches, 256 rows otherwise
    # (256x128 f32 tile = 128 KiB; double-buffered x/out + resident 192 KiB
    #  weight slab is well under v7x's 32 MiB default scoped VMEM).
    tile_b = min(256, _round_up(x.shape[0], SUBLANE))
    return linear_qnet_forward_packed(x, w_slab, b_slab, out_size, tile_b)


def init_linear_params(key, in_features, out_features):
    """PyTorch-style nn.Linear init (uniform +/- 1/sqrt(fan_in)).

    Returns W already transposed to (in_features, out_features), b as (out,).
    """
    kw, kb = jax.random.split(key)
    bound = 1.0 / math.sqrt(in_features)
    w = jax.random.uniform(kw, (in_features, out_features), jnp.float32,
                           minval=-bound, maxval=bound)
    b = jax.random.uniform(kb, (out_features,), jnp.float32,
                           minval=-bound, maxval=bound)
    return w, b


def _reference(x, w1, b1, w2, b2, w3, b3):
    h = jnp.tanh(x @ w1 + b1)
    h = jnp.tanh(h @ w2 + b2)
    return h @ w3 + b3


if __name__ == "__main__":
    # Shapes consistent with the module's constructor arguments.
    input_size = 16
    hidden_size = 32
    hidden2_size = 32
    output_size = 4

    key = jax.random.PRNGKey(0)
    kx, kx2, k1, k2, k3 = jax.random.split(key, 5)

    w1, b1 = init_linear_params(k1, input_size, hidden_size)
    w2, b2 = init_linear_params(k2, hidden_size, hidden2_size)
    w3, b3 = init_linear_params(k3, hidden2_size, output_size)

    # --- case 1: tiny inference batch (original use case, B=2) --------------
    x = jax.random.normal(kx, (2, input_size), jnp.float32)
    out = jax.block_until_ready(linear_qnet_forward(x, w1, b1, w2, b2, w3, b3))
    ref = _reference(x, w1, b1, w2, b2, w3, b3)
    assert out.shape == (2, output_size)
    assert jnp.allclose(out, ref, atol=1e-5, rtol=1e-5)

    # --- case 2: batched path exercising the grid (multiple batch tiles) ----
    xb = jax.random.normal(kx2, (32, input_size), jnp.float32)
    w_slab, b_slab = pack_params(w1, b1, w2, b2, w3, b3)
    out_b = jax.block_until_ready(
        linear_qnet_forward_packed(xb, w_slab, b_slab, output_size, tile_b=8))
    ref_b = _reference(xb, w1, b1, w2, b2, w3, b3)
    assert out_b.shape == (32, output_size)
    assert jnp.allclose(out_b, ref_b, atol=1e-5, rtol=1e-5)

    # TODO(synk): the PyTorch module's save()/load() (torch checkpoint I/O) is
    # host-side serialization with no Pallas equivalent; not implemented.

    print("KERNEL_OK")
</pallas_src>

<mosaic_0001>
module attributes {stable_mosaic.version = 11 : i64} {
  func.func @_mlp_kernel(%arg0: i32, %arg1: memref<8x128xf32, #tpu.memory_space<vmem>>, %arg2: memref<3x128x128xf32, #tpu.memory_space<vmem>>, %arg3: memref<3x128xf32, #tpu.memory_space<vmem>>, %arg4: memref<8x128xf32, #tpu.memory_space<vmem>>) attributes {dimension_semantics = [#tpu.dimension_semantics<parallel>], iteration_bounds = array<i64: 1>, scalar_prefetch = 0 : i64, scratch_operands = 0 : i64, tpu.core_type = #tpu.core_type<tc>, window_params = [{transform_indices = @transform_0, window_bounds = array<i64: 8, 128>}, {pipeline_mode = #tpu.pipeline_mode<synchronous>, transform_indices = @transform_1, window_bounds = array<i64: 3, 128, 128>}, {pipeline_mode = #tpu.pipeline_mode<synchronous>, transform_indices = @transform_2, window_bounds = array<i64: 3, 128>}, {transform_indices = @transform_3, window_bounds = array<i64: 8, 128>}]} {
    %c0 = arith.constant 0 : index
    %c0_0 = arith.constant 0 : index
    %0 = vector.load %arg1[%c0, %c0_0] : memref<8x128xf32, #tpu.memory_space<vmem>>, vector<8x128xf32>
    %c0_1 = arith.constant 0 : index
    %c0_2 = arith.constant 0 : index
    %1 = vector.load %arg3[%c0_1, %c0_2] : memref<3x128xf32, #tpu.memory_space<vmem>>, vector<3x128xf32>
    %c0_3 = arith.constant 0 : index
    %c0_4 = arith.constant 0 : index
    %c0_5 = arith.constant 0 : index
    %2 = vector.load %arg2[%c0_3, %c0_4, %c0_5] : memref<3x128x128xf32, #tpu.memory_space<vmem>>, vector<1x128x128xf32>
    %3 = vector.shape_cast %2 : vector<1x128x128xf32> to vector<128x128xf32>
    %cst = arith.constant dense<0.000000e+00> : vector<8x128xf32>
    %4 = tpu.matmul %0, %3, %cst {dimension_numbers = #tpu.dot_dimension_numbers<[1], [0], [0], [1], [0, 0, 1, 1], [], []>} : vector<8x128xf32>, vector<128x128xf32>, vector<8x128xf32> -> vector<8x128xf32>
    %5 = vector.extract_strided_slice %1 {offsets = [0, 0], sizes = [1, 128], strides = [1, 1]} : vector<3x128xf32> to vector<1x128xf32>
    %6 = vector.broadcast %5 : vector<1x128xf32> to vector<8x128xf32>
    %7 = arith.addf %4, %6 : vector<8x128xf32>
    %8 = math.tanh %7 : vector<8x128xf32>
    %c1 = arith.constant 1 : index
    %c0_6 = arith.constant 0 : index
    %c0_7 = arith.constant 0 : index
    %9 = vector.load %arg2[%c1, %c0_6, %c0_7] : memref<3x128x128xf32, #tpu.memory_space<vmem>>, vector<1x128x128xf32>
    %10 = vector.shape_cast %9 : vector<1x128x128xf32> to vector<128x128xf32>
    %cst_8 = arith.constant dense<0.000000e+00> : vector<8x128xf32>
    %11 = tpu.matmul %8, %10, %cst_8 {dimension_numbers = #tpu.dot_dimension_numbers<[1], [0], [0], [1], [0, 0, 1, 1], [], []>} : vector<8x128xf32>, vector<128x128xf32>, vector<8x128xf32> -> vector<8x128xf32>
    %12 = vector.extract_strided_slice %1 {offsets = [1, 0], sizes = [1, 128], strides = [1, 1]} : vector<3x128xf32> to vector<1x128xf32>
    %13 = vector.broadcast %12 : vector<1x128xf32> to vector<8x128xf32>
    %14 = arith.addf %11, %13 : vector<8x128xf32>
    %15 = math.tanh %14 : vector<8x128xf32>
    %c2 = arith.constant 2 : index
    %c0_9 = arith.constant 0 : index
    %c0_10 = arith.constant 0 : index
    %16 = vector.load %arg2[%c2, %c0_9, %c0_10] : memref<3x128x128xf32, #tpu.memory_space<vmem>>, vector<1x128x128xf32>
    %17 = vector.shape_cast %16 : vector<1x128x128xf32> to vector<128x128xf32>
    %cst_11 = arith.constant dense<0.000000e+00> : vector<8x128xf32>
    %18 = tpu.matmul %15, %17, %cst_11 {dimension_numbers = #tpu.dot_dimension_numbers<[1], [0], [0], [1], [0, 0, 1, 1], [], []>} : vector<8x128xf32>, vector<128x128xf32>, vector<8x128xf32> -> vector<8x128xf32>
    %19 = vector.extract_strided_slice %1 {offsets = [2, 0], sizes = [1, 128], strides = [1, 1]} : vector<3x128xf32> to vector<1x128xf32>
    %20 = vector.broadcast %19 : vector<1x128xf32> to vector<8x128xf32>
    %21 = arith.addf %18, %20 : vector<8x128xf32>
    %c0_12 = arith.constant 0 : index
    %c0_13 = arith.constant 0 : index
    %22 = vector.load %arg4[%c0_12, %c0_13] : memref<8x128xf32, #tpu.memory_space<vmem>>, vector<8x128xf32>
    tpu.vector_store %arg4[%c0_12, %c0_13], %21 {strides = array<i32>} : memref<8x128xf32, #tpu.memory_space<vmem>>, vector<8x128xf32>,
    return
  }
  func.func @transform_0(%arg0: i32) -> (i32, i32) {
    %c0_i32 = arith.constant 0 : i32
    %c0_i32_0 = arith.constant 0 : i32
    return %arg0, %c0_i32 : i32, i32
  }
  func.func @transform_1(%arg0: i32) -> (i32, i32, i32) {
    %c0_i32 = arith.constant 0 : i32
    %c0_i32_0 = arith.constant 0 : i32
    %c0_i32_1 = arith.constant 0 : i32
    %c0_i32_2 = arith.constant 0 : i32
    return %c0_i32, %c0_i32_0, %c0_i32_1 : i32, i32, i32
  }
  func.func @transform_2(%arg0: i32) -> (i32, i32) {
    %c0_i32 = arith.constant 0 : i32
    %c0_i32_0 = arith.constant 0 : i32
    %c0_i32_1 = arith.constant 0 : i32
    return %c0_i32, %c0_i32_0 : i32, i32
  }
  func.func @transform_3(%arg0: i32) -> (i32, i32) {
    %c0_i32 = arith.constant 0 : i32
    %c0_i32_0 = arith.constant 0 : i32
    return %arg0, %c0_i32 : i32, i32
  }
}

</mosaic_0001>

<llo_original>
// kernel: linear_qnet_forward_packed.1
$region0: #{linear_qnet_forward_packed.1}
  #allocation0 [shape = 'u32[]', space=smem, size = 0x4, offset = 0x4, fixed_abs, tag = 'smem constant byte address 0x4 - core index']
  #allocation1 [shape = 'u32[72,128]{1,0:T(1,128)}', space=vmem, size = 0x9000, scoped, tag = 'internal scratch']
  %s0 = inlined_call_operand.vmem [shape: f32[8,128], index: 0, kind: input, shape index: {}]
  %s1 = inlined_call_operand.hbm [shape: f32[3,128,128], index: 1, kind: input, shape index: {}]
  %s2 = inlined_call_operand.vmem [shape: f32[3,128], index: 2, kind: input, shape index: {}]
  %s3 = inlined_call_operand.vmem [shape: f32[8,128], index: 3, kind: output, shape index: {}]
  %s4 = sld [smem:[#allocation0]]
  $region26: #{linear_qnet_forward_packed.1} parent=0
    _
  %s6 = ssub.s32 1, %s4
  %s7 = scalar_select 0, %s6, %s4
  $region1: #{linear_qnet_forward_packed.1} parent=0
    #allocation2 [shape = 'u8[196608]{0}', space=vmem, size = 0x30000, scoped, tag = 'input window, operand 1, single buffered']
    #allocation3 [shape = 's32[1]{0}', space=sflag, size = 0x4, scoped, tag = 'scoped memory for linear_qnet_forward_packed.1']
    %8 = vsyncpa [#allocation3], 0
    // Predicated region
    $region2: #{linear_qnet_forward_packed.1} parent=1 // pred_check
      _
    $region3: #{linear_qnet_forward_packed.1} parent=1 // pred_check_branch
      %10 = sbr.rel (0) target = $region5
    $region4: #{linear_qnet_forward_packed.1} parent=1 // pred_region
      _
    $region5: #{linear_qnet_forward_packed.1} parent=1 // pred_fallthru
      _
    // Predicated region
    $region6: #{linear_qnet_forward_packed.1} parent=1 // pred_check
      _
    $region7: #{linear_qnet_forward_packed.1} parent=1 // pred_check_branch
      %12 = sbr.rel (0) target = $region9
    $region8: #{linear_qnet_forward_packed.1} parent=1 // pred_region
      %14 = vsyncadd [#allocation3], 0
      %s15 = sshll.u32 %s1, 4
      %s16 = int_to_ptr.hbm [resolvable:$true] %s15
      %s17 = sshll.u32 [#allocation2], 4
      %s18 = int_to_ptr.vmem [resolvable:$true] %s17
      %23 = dma.hbm_to_vmem [thread:$0]  %s16, 6144, %s18, [#allocation3], 128, 128, 8
    $region9: #{linear_qnet_forward_packed.1} parent=1 // pred_fallthru
      _
    // Predicated region
    $region10: #{linear_qnet_forward_packed.1} parent=1 // pred_check
      _
    $region11: #{linear_qnet_forward_packed.1} parent=1 // pred_check_branch
      %25 = sbr.rel (0) target = $region13
    $region12: #{linear_qnet_forward_packed.1} parent=1 // pred_region
      _
    $region13: #{linear_qnet_forward_packed.1} parent=1 // pred_fallthru
      _
    // Predicated region
    $region14: #{linear_qnet_forward_packed.1} parent=1 // pred_check
      _
    $region15: #{linear_qnet_forward_packed.1} parent=1 // pred_check_branch
      %27 = sbr.rel (0) target = $region17
    $region16: #{linear_qnet_forward_packed.1} parent=1 // pred_region
      %29 = dma.done [#allocation3], 6144
    $region17: #{linear_qnet_forward_packed.1} parent=1 // pred_fallthru
      _
    %v30 = vld [vmem:[%s0] sm:$0xff]
    %v31 = vld [vmem:[%s2] sm:$0x7]
    %v32 = vld [vmem:[#allocation2] sm:$0xff]
    %v33 = vld [vmem:[#allocation2 + $0x8] sm:$0xff]
    %v34 = vld [vmem:[#allocation2 + $0x10] sm:$0xff]
    %v35 = vld [vmem:[#allocation2 + $0x18] sm:$0xff]
    %v36 = vld [vmem:[#allocation2 + $0x20] sm:$0xff]
    %v37 = vld [vmem:[#allocation2 + $0x28] sm:$0xff]
    %v38 = vld [vmem:[#allocation2 + $0x30] sm:$0xff]
    %v39 = vld [vmem:[#allocation2 + $0x38] sm:$0xff]
    %v40 = vld [vmem:[#allocation2 + $0x40] sm:$0xff]
    %v41 = vld [vmem:[#allocation2 + $0x48] sm:$0xff]
    %v42 = vld [vmem:[#allocation2 + $0x50] sm:$0xff]
    %v43 = vld [vmem:[#allocation2 + $0x58] sm:$0xff]
    %v44 = vld [vmem:[#allocation2 + $0x60] sm:$0xff]
    %v45 = vld [vmem:[#allocation2 + $0x68] sm:$0xff]
    %v46 = vld [vmem:[#allocation2 + $0x70] sm:$0xff]
    %v47 = vld [vmem:[#allocation2 + $0x78] sm:$0xff]
    %v48 = vperm.slane %v31, 0
    %49 = vmatpush.msra.mxu0 %v47
    %50 = vmatpush.msra.mxu0 %v46
    %51 = vmatpush.msra.mxu0 %v45
    %52 = vmatpush.msra.mxu0 %v44
    %53 = vmatpush.msra.mxu0 %v43
    %54 = vmatpush.msra.mxu0 %v42
    %55 = vmatpush.msra.mxu0 %v41
    %56 = vmatpush.msra.mxu0 %v40
    %57 = vmatpush.msra.mxu0 %v39
    %58 = vmatpush.msra.mxu0 %v38
    %59 = vmatpush.msra.mxu0 %v37
    %60 = vmatpush.msra.mxu0 %v36
    %61 = vmatpush.msra.mxu0 %v35
    %62 = vmatpush.msra.mxu0 %v34
    %63 = vmatpush.msra.mxu0 %v33
    %64 = vmatpush.msra.mxu0 %v32
    %65 = vmatmul.f32.gmra.mxu0 %v30
    %v66 = vpop.f32.mrf.mxu0
    %v67 = vadd.f32 %v48, %v66
    %68 = vdwg.mxu0
    %v69 = vtanh.pop %v67
    %s70 = scalar_lea.vmem [#allocation2], 128
    %v71 = vld [vmem:[%s70] sm:$0xff]
    %v72 = vld [vmem:[%s70 + $0x8] sm:$0xff]
    %v73 = vld [vmem:[%s70 + $0x10] sm:$0xff]
    %v74 = vld [vmem:[%s70 + $0x18] sm:$0xff]
    %v75 = vld [vmem:[%s70 + $0x20] sm:$0xff]
    %v76 = vld [vmem:[%s70 + $0x28] sm:$0xff]
    %v77 = vld [vmem:[%s70 + $0x30] sm:$0xff]
    %v78 = vld [vmem:[%s70 + $0x38] sm:$0xff]
    %v79 = vld [vmem:[%s70 + $0x40] sm:$0xff]
    %v80 = vld [vmem:[%s70 + $0x48] sm:$0xff]
    %v81 = vld [vmem:[%s70 + $0x50] sm:$0xff]
    %v82 = vld [vmem:[%s70 + $0x58] sm:$0xff]
    %v83 = vld [vmem:[%s70 + $0x60] sm:$0xff]
    %v84 = vld [vmem:[%s70 + $0x68] sm:$0xff]
    %v85 = vld [vmem:[%s70 + $0x70] sm:$0xff]
    %v86 = vld [vmem:[%s70 + $0x78] sm:$0xff]
    %v87 = vperm.slane %v31, 1
    %88 = vmatpush.msra.mxu0 %v86
    %89 = vmatpush.msra.mxu0 %v85
    %90 = vmatpush.msra.mxu0 %v84
    %91 = vmatpush.msra.mxu0 %v83
    %92 = vmatpush.msra.mxu0 %v82
    %93 = vmatpush.msra.mxu0 %v81
    %94 = vmatpush.msra.mxu0 %v80
    %95 = vmatpush.msra.mxu0 %v79
    %96 = vmatpush.msra.mxu0 %v78
    %97 = vmatpush.msra.mxu0 %v77
    %98 = vmatpush.msra.mxu0 %v76
    %99 = vmatpush.msra.mxu0 %v75
    %100 = vmatpush.msra.mxu0 %v74
    %101 = vmatpush.msra.mxu0 %v73
    %102 = vmatpush.msra.mxu0 %v72
    %103 = vmatpush.msra.mxu0 %v71
    %104 = vmatmul.f32.gmra.mxu0 %v69
    %v105 = vpop.f32.mrf.mxu0
    %v106 = vadd.f32 %v87, %v105
    %107 = vdwg.mxu0
    %v108 = vtanh.pop %v106
    %s109 = scalar_lea.vmem [#allocation2], 256
    %v110 = vld [vmem:[%s109] sm:$0xff]
    %v111 = vld [vmem:[%s109 + $0x8] sm:$0xff]
    %v112 = vld [vmem:[%s109 + $0x10] sm:$0xff]
    %v113 = vld [vmem:[%s109 + $0x18] sm:$0xff]
    %v114 = vld [vmem:[%s109 + $0x20] sm:$0xff]
    %v115 = vld [vmem:[%s109 + $0x28] sm:$0xff]
    %v116 = vld [vmem:[%s109 + $0x30] sm:$0xff]
    %v117 = vld [vmem:[%s109 + $0x38] sm:$0xff]
    %v118 = vld [vmem:[%s109 + $0x40] sm:$0xff]
    %v119 = vld [vmem:[%s109 + $0x48] sm:$0xff]
    %v120 = vld [vmem:[%s109 + $0x50] sm:$0xff]
    %v121 = vld [vmem:[%s109 + $0x58] sm:$0xff]
    %v122 = vld [vmem:[%s109 + $0x60] sm:$0xff]
    %v123 = vld [vmem:[%s109 + $0x68] sm:$0xff]
    %v124 = vld [vmem:[%s109 + $0x70] sm:$0xff]
    %v125 = vld [vmem:[%s109 + $0x78] sm:$0xff]
    %v126 = vperm.slane %v31, 2
    %127 = vmatpush.msra.mxu0 %v125
    %128 = vmatpush.msra.mxu0 %v124
    %129 = vmatpush.msra.mxu0 %v123
    %130 = vmatpush.msra.mxu0 %v122
    %131 = vmatpush.msra.mxu0 %v121
    %132 = vmatpush.msra.mxu0 %v120
    %133 = vmatpush.msra.mxu0 %v119
    %134 = vmatpush.msra.mxu0 %v118
    %135 = vmatpush.msra.mxu0 %v117
    %136 = vmatpush.msra.mxu0 %v116
    %137 = vmatpush.msra.mxu0 %v115
    %138 = vmatpush.msra.mxu0 %v114
    %139 = vmatpush.msra.mxu0 %v113
    %140 = vmatpush.msra.mxu0 %v112
    %141 = vmatpush.msra.mxu0 %v111
    %142 = vmatpush.msra.mxu0 %v110
    %143 = vmatmul.f32.gmra.mxu0 %v108
    %v144 = vpop.f32.mrf.mxu0
    %v145 = vadd.f32 %v126, %v144
    %146 = vdwg.mxu0
    %147 = vst [vmem:[%s3] sm:$0xff] %v145
    // Predicated region
    $region18: #{linear_qnet_forward_packed.1} parent=1 // pred_check
      _
    $region19: #{linear_qnet_forward_packed.1} parent=1 // pred_check_branch
      %149 = sbr.rel (0) target = $region21
    $region20: #{linear_qnet_forward_packed.1} parent=1 // pred_region
      _
    $region21: #{linear_qnet_forward_packed.1} parent=1 // pred_fallthru
      _
    // Predicated region
    $region22: #{linear_qnet_forward_packed.1} parent=1 // pred_check
      _
    $region23: #{linear_qnet_forward_packed.1} parent=1 // pred_check_branch
      %151 = sbr.rel (0) target = $region25
    $region24: #{linear_qnet_forward_packed.1} parent=1 // pred_region
      _
    $region25: #{linear_qnet_forward_packed.1} parent=1 // pred_fallthru
      _
    %152 = vsyncpa [#allocation3], 1

</llo_original>
